<compile_context>
chip_gen: v5e
topology: v5e:2x2
jax: 0.10.0
libtpu: 0.0.40
codegen_flags: <defaults>
</compile_context>

<pallas_src>
import functools

import jax
import jax.numpy as jnp
from jax.experimental import pallas as pl
from jax.experimental.pallas import tpu as pltpu


def _gap_kernel(x_ref, o_ref, acc_ref, *, inv_hw):
    # x_ref:   (row_tile, hw_chunk) block in VMEM
    # o_ref:   (row_tile, 1) output block (resident across the reduction axis)
    # acc_ref: (row_tile, 1) f32 accumulator scratch
    k = pl.program_id(1)

    @pl.when(k == 0)
    def _init():
        acc_ref[...] = jnp.zeros_like(acc_ref)

    # DMA the narrow dtype, upcast in-register; VPU add + XLU cross-lane reduce
    # (no MXU -- this op is pure HBM streaming).
    x = x_ref[...].astype(jnp.float32)
    acc_ref[...] += jnp.sum(x, axis=-1, keepdims=True)

    @pl.when(k == pl.num_programs(1) - 1)
    def _finalize():
        # Multiply by the static reciprocal of the *logical* H*W (not the
        # lane-padded width), then cast back to the input dtype.
        o_ref[...] = (acc_ref[...] * inv_hw).astype(o_ref.dtype)


def _round_up(v, m):
    return ((v + m - 1) // m) * m


def global_avg_pool2d(x, *, block_bytes=4 * 1024 * 1024,
                      vmem_limit_bytes=32 * 1024 * 1024):
    """x: (N, C, H, W) -> (N, C, 1, 1), averaging over H and W."""
    N, C, H, W = x.shape
    rows = N * C
    hw = H * W
    x2 = x.reshape(rows, hw)
    itemsize = jnp.dtype(x2.dtype).itemsize

    # dtype-matched sublane packing: 8 rows for 4-byte, 16 for 2-byte, 32 for 1-byte.
    sub = 8 * max(1, 4 // itemsize)

    # ---- reduction-axis chunk (usually the whole spatial extent) -------------
    hw_chunk = hw
    if sub * hw * itemsize > block_bytes and hw % 128 == 0:
        # Even a minimal row tile exceeds the block budget: split H*W.  The
        # chunk must be a multiple of 128 that divides hw exactly, otherwise
        # out-of-bounds lanes would pollute valid rows' sums.
        target = max(128, (block_bytes // (sub * itemsize)) // 128 * 128)
        c = min(target, hw)
        hw_chunk = 128
        while c >= 128:
            if hw % c == 0:
                hw_chunk = c
                break
            c -= 128
    num_hw_chunks = hw // hw_chunk

    # ---- row tile: as large as the per-block byte budget allows --------------
    if rows <= sub:
        row_tile = rows  # full-dim block is always legal, even if < 8
    else:
        rows_ceil = _round_up(rows, sub)
        fit = max(sub, (block_bytes // (hw_chunk * itemsize)) // sub * sub)
        row_tile = min(fit, rows_ceil)
        # Keep >= 2 blocks on the parallel axis when possible so v7x's two
        # TensorCores both get work (harmless on v5e/v6e).
        half = _round_up(pl.cdiv(rows_ceil, 2), sub)
        row_tile = min(row_tile, half)
    num_row_blocks = pl.cdiv(rows, row_tile)

    # Scoped-VMEM budget: double-buffered input block + tiny output/scratch.
    block_in_bytes = row_tile * hw_chunk * itemsize
    vmem_limit = max(vmem_limit_bytes, 2 * block_in_bytes + (4 << 20))

    out = pl.pallas_call(
        functools.partial(_gap_kernel, inv_hw=1.0 / hw),
        out_shape=jax.ShapeDtypeStruct((rows, 1), x.dtype),
        grid_spec=pltpu.PrefetchScalarGridSpec(
            num_scalar_prefetch=0,
            grid=(num_row_blocks, num_hw_chunks),
            in_specs=[pl.BlockSpec((row_tile, hw_chunk), lambda i, k: (i, k))],
            out_specs=pl.BlockSpec((row_tile, 1), lambda i, k: (i, 0)),
            scratch_shapes=[pltpu.VMEM((row_tile, 1), jnp.float32)],
        ),
        compiler_params=pltpu.CompilerParams(
            dimension_semantics=("parallel", "arbitrary"),
            vmem_limit_bytes=vmem_limit,
        ),
    )(x2)

    return out.reshape(N, C, 1, 1)


if __name__ == "__main__":
    key = jax.random.PRNGKey(0)

    # Shape implied by the module's typical use (small, deterministic).
    x = jax.random.normal(key, (2, 4, 16, 16), dtype=jnp.float32)
    y = global_avg_pool2d(x)
    jax.block_until_ready(y)
    ref = jnp.mean(x, axis=(2, 3), keepdims=True)
    assert y.shape == (2, 4, 1, 1), y.shape
    assert jnp.allclose(y, ref, atol=1e-5), (y, ref)

    # Second small case: exercises multi-block grid + ragged last row block
    # (rows = 40 not a multiple of the row tile) and non-multiple-of-128 H*W.
    x2 = jax.random.normal(jax.random.PRNGKey(1), (2, 20, 14, 14),
                           dtype=jnp.float32)
    y2 = global_avg_pool2d(x2)
    jax.block_until_ready(y2)
    ref2 = jnp.mean(x2, axis=(2, 3), keepdims=True)
    assert y2.shape == (2, 20, 1, 1), y2.shape
    assert jnp.allclose(y2, ref2, atol=1e-5), (y2, ref2)

    print("KERNEL_OK")
</pallas_src>

<mosaic_0001>
module attributes {stable_mosaic.version = 11 : i64} {
  func.func @_gap_kernel(%arg0: i32, %arg1: i32, %arg2: memref<8x256xf32, #tpu.memory_space<vmem>>, %arg3: memref<8x1xf32, #tpu.memory_space<vmem>>, %arg4: memref<8x1xf32, #tpu.memory_space<vmem>>) attributes {dimension_semantics = [#tpu.dimension_semantics<parallel>, #tpu.dimension_semantics<arbitrary>], iteration_bounds = array<i64: 1, 1>, scalar_prefetch = 0 : i64, scratch_operands = 1 : i64, tpu.core_type = #tpu.core_type<tc>, window_params = [{transform_indices = @transform_0, window_bounds = array<i64: 8, 256>}, {transform_indices = @transform_1, window_bounds = array<i64: 8, 1>}]} {
    %c0_i32 = arith.constant 0 : i32
    %0 = arith.cmpi eq, %arg1, %c0_i32 : i32
    %1 = arith.extui %0 : i1 to i32
    %c0_i32_0 = arith.constant 0 : i32
    %2 = arith.cmpi ne, %1, %c0_i32_0 : i32
    scf.if %2 {
      %cst_8 = arith.constant 0.000000e+00 : f32
      %12 = vector.broadcast %cst_8 : f32 to vector<8x1xf32>
      %c0_9 = arith.constant 0 : index
      %c0_10 = arith.constant 0 : index
      %13 = vector.load %arg4[%c0_9, %c0_10] : memref<8x1xf32, #tpu.memory_space<vmem>>, vector<8x1xf32>
      tpu.vector_store %arg4[%c0_9, %c0_10], %12 {strides = array<i32>} : memref<8x1xf32, #tpu.memory_space<vmem>>, vector<8x1xf32>,
    } else {
    }
    %c0 = arith.constant 0 : index
    %c0_1 = arith.constant 0 : index
    %3 = vector.load %arg2[%c0, %c0_1] : memref<8x256xf32, #tpu.memory_space<vmem>>, vector<8x256xf32>
    %c0_2 = arith.constant 0 : index
    %c0_3 = arith.constant 0 : index
    %4 = vector.load %arg4[%c0_2, %c0_3] : memref<8x1xf32, #tpu.memory_space<vmem>>, vector<8x1xf32>
    %cst = arith.constant dense<0.000000e+00> : vector<8xf32>
    %5 = vector.multi_reduction <add>, %3, %cst [1] : vector<8x256xf32> to vector<8xf32>
    %6 = vector.shape_cast %5 : vector<8xf32> to vector<8x1xf32>
    %7 = arith.addf %4, %6 : vector<8x1xf32>
    %c0_4 = arith.constant 0 : index
    %c0_5 = arith.constant 0 : index
    %8 = vector.load %arg4[%c0_4, %c0_5] : memref<8x1xf32, #tpu.memory_space<vmem>>, vector<8x1xf32>
    tpu.vector_store %arg4[%c0_4, %c0_5], %7 {strides = array<i32>} : memref<8x1xf32, #tpu.memory_space<vmem>>, vector<8x1xf32>,
    %c0_i32_6 = arith.constant 0 : i32
    %9 = arith.cmpi eq, %arg1, %c0_i32_6 : i32
    %10 = arith.extui %9 : i1 to i32
    %c0_i32_7 = arith.constant 0 : i32
    %11 = arith.cmpi ne, %10, %c0_i32_7 : i32
    scf.if %11 {
      %c0_8 = arith.constant 0 : index
      %c0_9 = arith.constant 0 : index
      %12 = vector.load %arg4[%c0_8, %c0_9] : memref<8x1xf32, #tpu.memory_space<vmem>>, vector<8x1xf32>
      %cst_10 = arith.constant 3.906250e-03 : f32
      %13 = vector.broadcast %cst_10 : f32 to vector<8x1xf32>
      %14 = arith.mulf %12, %13 : vector<8x1xf32>
      %c0_11 = arith.constant 0 : index
      %c0_12 = arith.constant 0 : index
      %15 = vector.load %arg3[%c0_11, %c0_12] : memref<8x1xf32, #tpu.memory_space<vmem>>, vector<8x1xf32>
      tpu.vector_store %arg3[%c0_11, %c0_12], %14 {strides = array<i32>} : memref<8x1xf32, #tpu.memory_space<vmem>>, vector<8x1xf32>,
    } else {
    }
    return
  }
  func.func @transform_0(%arg0: i32, %arg1: i32) -> (i32, i32) {
    %c0_i32 = arith.constant 0 : i32
    return %arg0, %arg1 : i32, i32
  }
  func.func @transform_1(%arg0: i32, %arg1: i32) -> (i32, i32) {
    %c0_i32 = arith.constant 0 : i32
    %c0_i32_0 = arith.constant 0 : i32
    return %arg0, %c0_i32 : i32, i32
  }
}

</mosaic_0001>

<llo_original>
// kernel: tpu_custom_call.1
$region0: #{tpu_custom_call.1}
  #allocation0 [shape = 'u32[]', space=smem, size = 0x4, offset = 0x4, fixed_abs, tag = 'smem constant byte address 0x4 - core index']
  #allocation1 [shape = 'u32[72,128]{1,0:T(1,128)}', space=vmem, size = 0x9000, scoped, tag = 'internal scratch']
  #allocation2 [shape = 'f32[8,1]{1,0:T(8,128)}', space=vmem, size = 0x1000, scoped, tag = 'scratch operand']
  %s0 = inlined_call_operand.hbm [shape: f32[8,256], index: 0, kind: input, shape index: {}]
  %s1 = inlined_call_operand.vmem [shape: f32[8,1], index: 1, kind: output, shape index: {}]
  %s2 = sld [smem:[#allocation0]]
  $region26: #{tpu_custom_call.1} parent=0
    _
  %s4 = ssub.s32 1, %s2
  %s5 = scalar_select 0, %s4, %s2
  $region1: #{tpu_custom_call.1} parent=0
    #allocation3 [shape = 'u8[8192]{0}', space=vmem, size = 0x2000, scoped, tag = 'input window, operand 0, single buffered']
    #allocation4 [shape = 's32[1]{0}', space=sflag, size = 0x4, scoped, tag = 'scoped memory for tpu_custom_call.1']
    %6 = vsyncpa [#allocation4], 0
    // Predicated region
    $region2: #{tpu_custom_call.1} parent=1 // pred_check
      _
    $region3: #{tpu_custom_call.1} parent=1 // pred_check_branch
      %8 = sbr.rel (0) target = $region5
    $region4: #{tpu_custom_call.1} parent=1 // pred_region
      %10 = vsyncadd [#allocation4], 0
      %s12 = sshll.u32 %s0, 4
      %s13 = int_to_ptr.hbm [resolvable:$true] %s12
      %s14 = sshll.u32 [#allocation3], 4
      %s15 = int_to_ptr.vmem [resolvable:$true] %s14
      %17 = dma.hbm_to_vmem [thread:$0]  %s13, 256, %s15, [#allocation4]
    $region5: #{tpu_custom_call.1} parent=1 // pred_fallthru
      _
    // Predicated region
    $region6: #{tpu_custom_call.1} parent=1 // pred_check
      _
    $region7: #{tpu_custom_call.1} parent=1 // pred_check_branch
      %19 = sbr.rel (0) target = $region9
    $region8: #{tpu_custom_call.1} parent=1 // pred_region
      %21 = dma.done [#allocation4], 256
    $region9: #{tpu_custom_call.1} parent=1 // pred_fallthru
      _
    %p22 = scmp.eq.s32.totalorder 0, 0
    // Predicated region
    $region10: #{tpu_custom_call.1} parent=1 // pred_check
      %p23 = pneg %p22
    $region11: #{tpu_custom_call.1} parent=1 // pred_check_branch
      %25 = sbr.rel (%p23) target = $region13
    $region12: #{tpu_custom_call.1} parent=1 // pred_region
      %vm26 = vcmask 7168
      %27 = vst.msk [vmem:[#allocation2] sm:$0xff] %vm26, 0.0
    $region13: #{tpu_custom_call.1} parent=1 // pred_fallthru
      _
    %v28 = vld [vmem:[#allocation3] sm:$0xff]
    %v29 = vld [vmem:[#allocation3 + $0x8] sm:$0xff]
    %v30 = vld [vmem:[#allocation2] sm:$0xff]
    %v31 = vadd.f32 %v28, %v29
    %32 = vadd.xlane.f32.xlu0 %v31
    %v33 = vpop.xlane.xlu0 %32
    %v34 = vadd.f32 %v30, %v33
    %vm35 = vcmask 7168
    %36 = vst.msk [vmem:[#allocation2] sm:$0xff] %vm35, %v34
    // Predicated region
    $region14: #{tpu_custom_call.1} parent=1 // pred_check
      %p37 = pneg %p22
    $region15: #{tpu_custom_call.1} parent=1 // pred_check_branch
      %39 = sbr.rel (%p37) target = $region17
    $region16: #{tpu_custom_call.1} parent=1 // pred_region
      %v40 = vld [vmem:[#allocation2] sm:$0xff]
      %v41 = vmul.f32 %v40, 0.00390625
      %42 = vst.msk [vmem:[%s1] sm:$0xff] %vm35, %v41
    $region17: #{tpu_custom_call.1} parent=1 // pred_fallthru
      _
    // Predicated region
    $region18: #{tpu_custom_call.1} parent=1 // pred_check
      _
    $region19: #{tpu_custom_call.1} parent=1 // pred_check_branch
      %44 = sbr.rel (0) target = $region21
    $region20: #{tpu_custom_call.1} parent=1 // pred_region
      _
    $region21: #{tpu_custom_call.1} parent=1 // pred_fallthru
      _
    // Predicated region
    $region22: #{tpu_custom_call.1} parent=1 // pred_check
      _
    $region23: #{tpu_custom_call.1} parent=1 // pred_check_branch
      %46 = sbr.rel (0) target = $region25
    $region24: #{tpu_custom_call.1} parent=1 // pred_region
      _
    $region25: #{tpu_custom_call.1} parent=1 // pred_fallthru
      _
    %47 = vsyncpa [#allocation4], 1

</llo_original>
